<compile_context>
chip_gen: v5e
topology: v5e:2x2
jax: 0.10.0
libtpu: 0.0.40
codegen_flags: <defaults>
</compile_context>

<pallas_src>
import math
import numpy as np
import jax
import jax.numpy as jnp
from jax import lax
from jax.experimental import pallas as pl
from jax.experimental.pallas import tpu as pltpu

N = 16            # number of nodes
NHID = 64         # hidden width (module default nhid=64)
K = 2             # GPR propagation steps
ALPHA = 0.1
SCORE_DIM = 32    # G_att num_out_features
HEADS = 1         # G_att num_of_heads
RATIO = 0.8
EDGE_RATIO = 0.6

KN = int(math.ceil(RATIO * N))           # nodes kept by top-k
Q_PCT = int(100 * (1 - EDGE_RATIO))      # percentile for the edge cut (matches np.percentile int q)
SCORE_LANES = 128                        # lane-dense score slab width

_VMEM = lambda: pl.BlockSpec(memory_space=pltpu.MemorySpace.VMEM)
_SMEM = lambda: pl.BlockSpec(memory_space=pltpu.MemorySpace.SMEM)


# ----------------------------- Pallas kernels -----------------------------

def _gpr_att_kernel(temp_ref, prop_ref, x_ref, wsc_ref, ecnt_ref, ecnt_t_ref,
                    csym_ref, adj_ref):
    # ---- GPR_prop.forward: hidden = sum_k temp[k] * prop^k @ x ----
    # temp lives in SMEM -> scalar reads + VPU broadcast (no lane slicing).
    x = x_ref[...]
    hidden = x * temp_ref[0, 0]
    cur = x
    for k in range(K):
        cur = jnp.dot(prop_ref[...], cur, preferred_element_type=jnp.float32)
        hidden = hidden + temp_ref[0, k + 1] * cur

    # ---- graph_attention node scores with scoring vectors folded into the
    # projection: col 0 of wsc = Wproj.T @ a_src, col 1 = Wproj.T @ a_trg ----
    scores = jnp.dot(hidden, wsc_ref[...], preferred_element_type=jnp.float32)  # (N, 128)

    i_row = lax.broadcasted_iota(jnp.int32, (N, N), 0)
    i_col = lax.broadcasted_iota(jnp.int32, (N, N), 1)
    eye = (i_row == i_col).astype(jnp.float32)
    ones_nn = jnp.ones((N, N), jnp.float32)

    s_src_col = jnp.broadcast_to(scores[:, 0:1], (N, N))   # [i, j] = s_src[i]
    s_trg_col = jnp.broadcast_to(scores[:, 1:2], (N, N))   # [i, j] = s_trg[i]
    # row orientation via ones @ diag(v) -- avoids an XLU transpose
    s_src_row = jnp.dot(ones_nn, eye * s_src_col, preferred_element_type=jnp.float32)
    s_trg_row = jnp.dot(ones_nn, eye * s_trg_col, preferred_element_type=jnp.float32)

    # per-edge attention sigmoid(s_src[src] + s_trg[trg]) evaluated densely
    att_fwd = 1.0 / (1.0 + jnp.exp(-(s_src_col + s_trg_row)))   # edge (i -> j)
    att_rev = 1.0 / (1.0 + jnp.exp(-(s_trg_col + s_src_row)))   # edge (j -> i)

    # add_self_loops(fill 1.0) + transpose + coalesce('mean'), all dense:
    #   S_sym = Ecnt*att_fwd + Ecnt^T*att_rev + 2*I,   adj = S_sym / C_sym  (on support)
    csym = csym_ref[...]
    s_sym = ecnt_ref[...] * att_fwd + ecnt_t_ref[...] * att_rev + 2.0 * eye
    adj_ref[...] = jnp.where(csym > 0.0, s_sym / jnp.maximum(csym, 1.0), 0.0)


def gpr_att(temp, prop, x, w_sc, ecnt, ecnt_t, csym):
    return pl.pallas_call(
        _gpr_att_kernel,
        out_shape=jax.ShapeDtypeStruct((N, N), jnp.float32),
        in_specs=[_SMEM()] + [_VMEM()] * 6,
        out_specs=_VMEM(),
    )(temp, prop, x, w_sc, ecnt, ecnt_t, csym)


def _pool_kernel(cut_ref, adj_ref, x_ref, w1_ref, w2_ref, b_ref,
                 out_ref, cutw_ref, score_ref):
    # ---- edge cut: keep coalesced attention >= percentile threshold ----
    cv = cut_ref[0, 0]                                    # SMEM scalar
    adj = adj_ref[...]
    w = jnp.where(jnp.logical_and(adj >= cv, adj > 0.0), adj, 0.0)
    cutw_ref[...] = w

    # ---- NodeInformationScore on the cut (dense, symmetric) adjacency ----
    # x_info[c] = x[c] - dinv[c] * sum_r w[r, c] * dinv[r] * x[r]
    # w is symmetric so a plain jnp.dot is exactly the column contraction.
    x = x_ref[...]
    deg = jnp.sum(w, axis=1, keepdims=True)
    dinv = jnp.where(deg > 0.0, lax.rsqrt(deg), 0.0)
    u = jnp.dot(w, dinv * x, preferred_element_type=jnp.float32)
    x_info = x - dinv * u
    score = jnp.sum(jnp.abs(x_info), axis=1, keepdims=True)        # (N, 1)
    score_ref[...] = jnp.broadcast_to(score, (N, SCORE_LANES))     # lane-dense writeback

    # ---- stable descending rank (ties broken by node index), in-kernel ----
    i_row = lax.broadcasted_iota(jnp.int32, (N, N), 0)
    i_col = lax.broadcasted_iota(jnp.int32, (N, N), 1)
    eye = (i_row == i_col).astype(jnp.float32)
    s_i = jnp.broadcast_to(score, (N, N))                          # [i, j] = score[i]
    s_j = jnp.dot(jnp.ones((N, N), jnp.float32), eye * s_i,
                  preferred_element_type=jnp.float32)              # [i, j] = score[j]
    gt = (s_j > s_i).astype(jnp.float32)
    eq_before = jnp.logical_and(s_j == s_i, i_col < i_row).astype(jnp.float32)
    rank = jnp.sum(gt + eq_before, axis=1, keepdims=True)          # (N, 1), exact ints in f32

    # ---- top-k selection as a permutation matrix: P[r, j] = (rank[j] == r) ----
    r_i = jnp.broadcast_to(rank, (N, N))
    r_cols = jnp.dot(jnp.ones((KN, N), jnp.float32), eye * r_i,
                     preferred_element_type=jnp.float32)           # (KN, N): [r, j] = rank[j]
    row_id = lax.broadcasted_iota(jnp.int32, (KN, N), 0).astype(jnp.float32)
    perm_mat = (r_cols == row_id).astype(jnp.float32)              # one-hot rows

    # ---- final readout: relu([x_topk | A[perm] @ x] @ W + b) ----
    x_topk = jnp.dot(perm_mat, x, preferred_element_type=jnp.float32)   # x[perm]
    cwx = jnp.dot(w, x, preferred_element_type=jnp.float32)             # A @ x
    m = jnp.dot(perm_mat, cwx, preferred_element_type=jnp.float32)      # A[perm] @ x
    y = (jnp.dot(x_topk, w1_ref[...], preferred_element_type=jnp.float32)
         + jnp.dot(m, w2_ref[...], preferred_element_type=jnp.float32)
         + b_ref[...])
    out_ref[...] = jnp.maximum(y, 0.0)


def pool_transform(cut_val, adj_mean, x, w1, w2, bias):
    return pl.pallas_call(
        _pool_kernel,
        out_shape=(jax.ShapeDtypeStruct((KN, NHID), jnp.float32),
                   jax.ShapeDtypeStruct((N, N), jnp.float32),
                   jax.ShapeDtypeStruct((N, SCORE_LANES), jnp.float32)),
        in_specs=[_SMEM()] + [_VMEM()] * 5,
        out_specs=(_VMEM(), _VMEM(), _VMEM()),
    )(cut_val, adj_mean, x, w1, w2, bias)


# ------------------------------ host-side static graph prep ----------------

def gcn_norm_dense(edge_index, num_nodes):
    """Dense D^-1/2 (A + I) D^-1/2, oriented so out = P @ x aggregates x[src] at dst."""
    A = np.zeros((num_nodes, num_nodes), np.float64)
    np.add.at(A, (edge_index[0], edge_index[1]), 1.0)
    d = np.diag(A).copy()
    np.fill_diagonal(A, np.where(d > 0, d, 1.0))          # add_remaining_self_loops, fill 1
    deg = A.sum(axis=0)
    dinv = np.where(deg > 0, deg ** -0.5, 0.0)
    nrm = dinv[:, None] * A * dinv[None, :]
    return nrm.T.astype(np.float32)                       # P[dst, src]


def build_forward(edge_index):
    """Jitted device-side CoPooling forward, closed over the static graph structure."""
    prop = jnp.asarray(gcn_norm_dense(edge_index, N))

    # dense directed-edge multiplicity (attention edges, no self loops yet)
    Ecnt_np = np.zeros((N, N), np.float64)
    np.add.at(Ecnt_np, (edge_index[0], edge_index[1]), 1.0)
    ecnt = jnp.asarray(Ecnt_np.astype(np.float32))
    ecnt_t = jnp.asarray(Ecnt_np.T.astype(np.float32))

    # symmetric coalesce counts / support from (edges + self loops) -> constants
    loop = np.arange(N, dtype=np.int64)
    ei_full = np.concatenate([edge_index, np.stack([loop, loop])], axis=1)
    C = np.zeros((N, N), np.float64)
    np.add.at(C, (ei_full[0], ei_full[1]), 1.0)
    C_sym = (C + C.T).astype(np.float32)
    mask_r, mask_c = np.nonzero(C_sym > 0)

    csym = jnp.asarray(C_sym)
    mr_j = jnp.asarray(mask_r.astype(np.int32))
    mc_j = jnp.asarray(mask_c.astype(np.int32))

    @jax.jit
    def forward(x, temp, w_sc, w1, w2, bias):
        # 1+2. GPR propagation + folded attention + dense coalesced adjacency (Pallas K1)
        adj_mean = gpr_att(temp, prop, x, w_sc, ecnt, ecnt_t, csym)

        # percentile threshold over the coalesced edge values (linear interp,
        # same as np.percentile with integer q in the original module).
        # TODO(synk): tiny device-side sort kept in jnp glue; no fixed-shape
        # in-kernel equivalent without an all-pairs rank count.
        edge_vals = adj_mean[mr_j, mc_j]
        cut_val = jnp.percentile(edge_vals, Q_PCT).reshape(1, 1).astype(jnp.float32)

        # 3. edge cut + info score + stable top-k + dense readout (Pallas K2)
        x_out, cut_w, score_slab = pool_transform(cut_val, adj_mean, x, w1, w2, bias)
        return x_out, cut_w, score_slab[:, 0]

    return forward


# --------------------------------- main ------------------------------------

if __name__ == "__main__":
    key = jax.random.PRNGKey(0)
    ks = jax.random.split(key, 6)

    # example input features
    x = jax.random.normal(ks[0], (N, NHID), jnp.float32)

    # GPR_prop PPR init of temp (reset_parameters)
    temp_np = ALPHA * (1.0 - ALPHA) ** np.arange(K + 1)
    temp_np[-1] = (1.0 - ALPHA) ** K
    temp = jnp.asarray(temp_np, jnp.float32).reshape(1, K + 1)

    def xavier(k, shape, fan_in, fan_out):
        a = math.sqrt(6.0 / (fan_in + fan_out))
        return jax.random.uniform(k, shape, jnp.float32, -a, a)

    wproj = xavier(ks[1], (HEADS * SCORE_DIM, NHID), NHID, HEADS * SCORE_DIM)  # linear_proj.weight
    a_src = xavier(ks[2], (1, HEADS * SCORE_DIM), SCORE_DIM, HEADS)            # scoring_fn_source
    a_trg = xavier(ks[3], (1, HEADS * SCORE_DIM), SCORE_DIM, HEADS)            # scoring_fn_target
    weight = xavier(ks[4], (2 * NHID, NHID), 2 * NHID, NHID)                   # self.weight
    bias = jnp.zeros((1, NHID), jnp.float32)                                   # self.bias

    # fold the attention vectors into the projection (host-side param prep):
    # s_src = x_cut @ (Wproj.T @ a_src), likewise for s_trg; padded lane-dense.
    wproj_t_np = np.asarray(wproj).T                                           # (NHID, 32)
    w_sc_np = np.zeros((NHID, SCORE_LANES), np.float32)
    w_sc_np[:, 0] = wproj_t_np @ np.asarray(a_src).ravel()
    w_sc_np[:, 1] = wproj_t_np @ np.asarray(a_trg).ravel()
    w_sc = jnp.asarray(w_sc_np)

    w1 = weight[:NHID, :]
    w2 = weight[NHID:, :]

    # deterministic small undirected graph (ring + chords, both directions)
    src, dst = [], []
    for i in range(N):
        j = (i + 1) % N
        src += [i, j]; dst += [j, i]
    for i in range(0, N, 4):
        j = (i + 5) % N
        src += [i, j]; dst += [j, i]
    edge_index = np.array([src, dst], dtype=np.int64)        # (2, 40)
    nodes_index = np.arange(N, dtype=np.int64)
    batch = np.zeros(N, dtype=np.int64)

    forward = build_forward(edge_index)
    x_out, cut_w, score = forward(x, temp, w_sc, w1, w2, bias)
    jax.block_until_ready((x_out, cut_w, score))

    # ---- post-hoc host bookkeeping (single device->host sync) ----
    # TODO(synk): variable-length edge-list outputs (cut / induced edge index,
    # perm relabelling) have no fixed-shape Pallas equivalent; kept as host
    # index bookkeeping on the final results.
    cut_w_np = np.asarray(cut_w)
    score_np = np.asarray(score)
    kr, kc = np.nonzero(cut_w_np > 0.0)
    cut_edge_index = np.stack([kr, kc]).astype(np.int64)
    cut_edge_attr = cut_w_np[kr, kc]
    perm = np.argsort(-score_np, kind="stable")[:KN]          # matches in-kernel stable rank
    batch_out = batch[perm]
    nodes_index_out = nodes_index[perm]
    node_attr_out = None
    relabel = -np.ones(N, dtype=np.int64)
    relabel[perm] = np.arange(KN)
    keep_e = (relabel[cut_edge_index[0]] >= 0) & (relabel[cut_edge_index[1]] >= 0)
    induced_edge_index = np.stack([relabel[cut_edge_index[0][keep_e]],
                                   relabel[cut_edge_index[1][keep_e]]])
    induced_edge_attr = cut_edge_attr[keep_e]
    attention_dense = cut_w_np                                # to_dense_adj(cut edges)

    assert x_out.shape == (KN, NHID)
    assert cut_w.shape == (N, N)
    print("KERNEL_OK")
</pallas_src>

<mosaic_0001>
module attributes {stable_mosaic.version = 11 : i64} {
  func.func @_gpr_att_kernel(%arg0: memref<1x3xf32, #tpu.memory_space<smem>>, %arg1: memref<16x16xf32, #tpu.memory_space<vmem>>, %arg2: memref<16x64xf32, #tpu.memory_space<vmem>>, %arg3: memref<64x128xf32, #tpu.memory_space<vmem>>, %arg4: memref<16x16xf32, #tpu.memory_space<vmem>>, %arg5: memref<16x16xf32, #tpu.memory_space<vmem>>, %arg6: memref<16x16xf32, #tpu.memory_space<vmem>>, %arg7: memref<16x16xf32, #tpu.memory_space<vmem>>) attributes {dimension_semantics = [], scalar_prefetch = 0 : i64, scratch_operands = 0 : i64, tpu.core_type = #tpu.core_type<tc>} {
    %c0 = arith.constant 0 : index
    %c0_0 = arith.constant 0 : index
    %0 = vector.load %arg2[%c0, %c0_0] : memref<16x64xf32, #tpu.memory_space<vmem>>, vector<16x64xf32>
    %c0_1 = arith.constant 0 : index
    %c0_2 = arith.constant 0 : index
    %1 = memref.load %arg0[%c0_1, %c0_2] : memref<1x3xf32, #tpu.memory_space<smem>>
    %2 = vector.broadcast %1 : f32 to vector<16x64xf32>
    %3 = arith.mulf %0, %2 : vector<16x64xf32>
    %c0_3 = arith.constant 0 : index
    %c0_4 = arith.constant 0 : index
    %4 = vector.load %arg1[%c0_3, %c0_4] : memref<16x16xf32, #tpu.memory_space<vmem>>, vector<16x16xf32>
    %cst = arith.constant dense<0.000000e+00> : vector<16x64xf32>
    %5 = tpu.matmul %4, %0, %cst {dimension_numbers = #tpu.dot_dimension_numbers<[1], [0], [0], [1], [0, 0, 1, 1], [], []>} : vector<16x16xf32>, vector<16x64xf32>, vector<16x64xf32> -> vector<16x64xf32>
    %c0_5 = arith.constant 0 : index
    %c1 = arith.constant 1 : index
    %6 = memref.load %arg0[%c0_5, %c1] : memref<1x3xf32, #tpu.memory_space<smem>>
    %7 = vector.broadcast %6 : f32 to vector<16x64xf32>
    %8 = arith.mulf %7, %5 : vector<16x64xf32>
    %9 = arith.addf %3, %8 : vector<16x64xf32>
    %c0_6 = arith.constant 0 : index
    %c0_7 = arith.constant 0 : index
    %10 = vector.load %arg1[%c0_6, %c0_7] : memref<16x16xf32, #tpu.memory_space<vmem>>, vector<16x16xf32>
    %cst_8 = arith.constant dense<0.000000e+00> : vector<16x64xf32>
    %11 = tpu.matmul %10, %5, %cst_8 {dimension_numbers = #tpu.dot_dimension_numbers<[1], [0], [0], [1], [0, 0, 1, 1], [], []>} : vector<16x16xf32>, vector<16x64xf32>, vector<16x64xf32> -> vector<16x64xf32>
    %c0_9 = arith.constant 0 : index
    %c2 = arith.constant 2 : index
    %12 = memref.load %arg0[%c0_9, %c2] : memref<1x3xf32, #tpu.memory_space<smem>>
    %13 = vector.broadcast %12 : f32 to vector<16x64xf32>
    %14 = arith.mulf %13, %11 : vector<16x64xf32>
    %15 = arith.addf %9, %14 : vector<16x64xf32>
    %c0_10 = arith.constant 0 : index
    %c0_11 = arith.constant 0 : index
    %16 = vector.load %arg3[%c0_10, %c0_11] : memref<64x128xf32, #tpu.memory_space<vmem>>, vector<64x128xf32>
    %cst_12 = arith.constant dense<0.000000e+00> : vector<16x128xf32>
    %17 = tpu.matmul %15, %16, %cst_12 {dimension_numbers = #tpu.dot_dimension_numbers<[1], [0], [0], [1], [0, 0, 1, 1], [], []>} : vector<16x64xf32>, vector<64x128xf32>, vector<16x128xf32> -> vector<16x128xf32>
    %18 = tpu.iota {dimensions = array<i32: 0>} : vector<16x16xi32>
    %19 = tpu.iota {dimensions = array<i32: 1>} : vector<16x16xi32>
    %20 = arith.cmpi eq, %18, %19 : vector<16x16xi32>
    %21 = arith.extui %20 : vector<16x16xi1> to vector<16x16xi32>
    %22 = arith.sitofp %21 : vector<16x16xi32> to vector<16x16xf32>
    %cst_13 = arith.constant 1.000000e+00 : f32
    %23 = vector.broadcast %cst_13 : f32 to vector<16x16xf32>
    %24 = vector.extract_strided_slice %17 {offsets = [0, 0], sizes = [16, 1], strides = [1, 1]} : vector<16x128xf32> to vector<16x1xf32>
    %25 = vector.shape_cast %24 : vector<16x1xf32> to vector<16x1xf32>
    %26 = vector.broadcast %25 : vector<16x1xf32> to vector<16x16xf32>
    %27 = vector.extract_strided_slice %17 {offsets = [0, 1], sizes = [16, 1], strides = [1, 1]} : vector<16x128xf32> to vector<16x1xf32>
    %28 = vector.shape_cast %27 : vector<16x1xf32> to vector<16x1xf32>
    %29 = vector.broadcast %28 : vector<16x1xf32> to vector<16x16xf32>
    %30 = arith.mulf %22, %26 : vector<16x16xf32>
    %cst_14 = arith.constant dense<0.000000e+00> : vector<16x16xf32>
    %31 = tpu.matmul %23, %30, %cst_14 {dimension_numbers = #tpu.dot_dimension_numbers<[1], [0], [0], [1], [0, 0, 1, 1], [], []>} : vector<16x16xf32>, vector<16x16xf32>, vector<16x16xf32> -> vector<16x16xf32>
    %32 = arith.mulf %22, %29 : vector<16x16xf32>
    %cst_15 = arith.constant dense<0.000000e+00> : vector<16x16xf32>
    %33 = tpu.matmul %23, %32, %cst_15 {dimension_numbers = #tpu.dot_dimension_numbers<[1], [0], [0], [1], [0, 0, 1, 1], [], []>} : vector<16x16xf32>, vector<16x16xf32>, vector<16x16xf32> -> vector<16x16xf32>
    %34 = arith.addf %26, %33 : vector<16x16xf32>
    %cst_16 = arith.constant 0.000000e+00 : f32
    %35 = vector.broadcast %cst_16 : f32 to vector<16x16xf32>
    %36 = arith.subf %35, %34 : vector<16x16xf32>
    %37 = math.exp %36 : vector<16x16xf32>
    %cst_17 = arith.constant 1.000000e+00 : f32
    %38 = vector.broadcast %cst_17 : f32 to vector<16x16xf32>
    %39 = arith.addf %38, %37 : vector<16x16xf32>
    %cst_18 = arith.constant 1.000000e+00 : f32
    %40 = vector.broadcast %cst_18 : f32 to vector<16x16xf32>
    %41 = arith.divf %40, %39 : vector<16x16xf32>
    %42 = arith.addf %29, %31 : vector<16x16xf32>
    %cst_19 = arith.constant 0.000000e+00 : f32
    %43 = vector.broadcast %cst_19 : f32 to vector<16x16xf32>
    %44 = arith.subf %43, %42 : vector<16x16xf32>
    %45 = math.exp %44 : vector<16x16xf32>
    %cst_20 = arith.constant 1.000000e+00 : f32
    %46 = vector.broadcast %cst_20 : f32 to vector<16x16xf32>
    %47 = arith.addf %46, %45 : vector<16x16xf32>
    %cst_21 = arith.constant 1.000000e+00 : f32
    %48 = vector.broadcast %cst_21 : f32 to vector<16x16xf32>
    %49 = arith.divf %48, %47 : vector<16x16xf32>
    %c0_22 = arith.constant 0 : index
    %c0_23 = arith.constant 0 : index
    %50 = vector.load %arg6[%c0_22, %c0_23] : memref<16x16xf32, #tpu.memory_space<vmem>>, vector<16x16xf32>
    %c0_24 = arith.constant 0 : index
    %c0_25 = arith.constant 0 : index
    %51 = vector.load %arg4[%c0_24, %c0_25] : memref<16x16xf32, #tpu.memory_space<vmem>>, vector<16x16xf32>
    %52 = arith.mulf %51, %41 : vector<16x16xf32>
    %c0_26 = arith.constant 0 : index
    %c0_27 = arith.constant 0 : index
    %53 = vector.load %arg5[%c0_26, %c0_27] : memref<16x16xf32, #tpu.memory_space<vmem>>, vector<16x16xf32>
    %54 = arith.mulf %53, %49 : vector<16x16xf32>
    %55 = arith.addf %52, %54 : vector<16x16xf32>
    %cst_28 = arith.constant 2.000000e+00 : f32
    %56 = vector.broadcast %cst_28 : f32 to vector<16x16xf32>
    %57 = arith.mulf %56, %22 : vector<16x16xf32>
    %58 = arith.addf %55, %57 : vector<16x16xf32>
    %cst_29 = arith.constant 0.000000e+00 : f32
    %59 = vector.broadcast %cst_29 : f32 to vector<16x16xf32>
    %60 = arith.cmpf ogt, %50, %59 : vector<16x16xf32>
    %cst_30 = arith.constant 1.000000e+00 : f32
    %61 = vector.broadcast %cst_30 : f32 to vector<16x16xf32>
    %62 = arith.maximumf %50, %61 : vector<16x16xf32>
    %63 = arith.divf %58, %62 : vector<16x16xf32>
    %cst_31 = arith.constant 0.000000e+00 : f32
    %64 = vector.broadcast %cst_31 : f32 to vector<16x16xf32>
    %65 = arith.select %60, %63, %64 : vector<16x16xi1>, vector<16x16xf32>
    %c0_32 = arith.constant 0 : index
    %c0_33 = arith.constant 0 : index
    %66 = vector.load %arg7[%c0_32, %c0_33] : memref<16x16xf32, #tpu.memory_space<vmem>>, vector<16x16xf32>
    tpu.vector_store %arg7[%c0_32, %c0_33], %65 {strides = array<i32>} : memref<16x16xf32, #tpu.memory_space<vmem>>, vector<16x16xf32>,
    return
  }
}

module attributes {stable_mosaic.version = 11 : i64} {
  func.func @_pool_kernel(%arg0: memref<1x1xf32, #tpu.memory_space<smem>>, %arg1: memref<16x16xf32, #tpu.memory_space<vmem>>, %arg2: memref<16x64xf32, #tpu.memory_space<vmem>>, %arg3: memref<64x64xf32, #tpu.memory_space<vmem>>, %arg4: memref<64x64xf32, #tpu.memory_space<vmem>>, %arg5: memref<1x64xf32, #tpu.memory_space<vmem>>, %arg6: memref<13x64xf32, #tpu.memory_space<vmem>>, %arg7: memref<16x16xf32, #tpu.memory_space<vmem>>, %arg8: memref<16x128xf32, #tpu.memory_space<vmem>>) attributes {dimension_semantics = [], scalar_prefetch = 0 : i64, scratch_operands = 0 : i64, tpu.core_type = #tpu.core_type<tc>} {
    %c0 = arith.constant 0 : index
    %c0_0 = arith.constant 0 : index
    %0 = memref.load %arg0[%c0, %c0_0] : memref<1x1xf32, #tpu.memory_space<smem>>
    %c0_1 = arith.constant 0 : index
    %c0_2 = arith.constant 0 : index
    %1 = vector.load %arg1[%c0_1, %c0_2] : memref<16x16xf32, #tpu.memory_space<vmem>>, vector<16x16xf32>
    %2 = vector.broadcast %0 : f32 to vector<16x16xf32>
    %3 = arith.cmpf oge, %1, %2 : vector<16x16xf32>
    %cst = arith.constant 0.000000e+00 : f32
    %4 = vector.broadcast %cst : f32 to vector<16x16xf32>
    %5 = arith.cmpf ogt, %1, %4 : vector<16x16xf32>
    %6 = arith.andi %3, %5 : vector<16x16xi1>
    %cst_3 = arith.constant 0.000000e+00 : f32
    %7 = vector.broadcast %cst_3 : f32 to vector<16x16xf32>
    %8 = arith.select %6, %1, %7 : vector<16x16xi1>, vector<16x16xf32>
    %c0_4 = arith.constant 0 : index
    %c0_5 = arith.constant 0 : index
    %9 = vector.load %arg7[%c0_4, %c0_5] : memref<16x16xf32, #tpu.memory_space<vmem>>, vector<16x16xf32>
    tpu.vector_store %arg7[%c0_4, %c0_5], %8 {strides = array<i32>} : memref<16x16xf32, #tpu.memory_space<vmem>>, vector<16x16xf32>,
    %c0_6 = arith.constant 0 : index
    %c0_7 = arith.constant 0 : index
    %10 = vector.load %arg2[%c0_6, %c0_7] : memref<16x64xf32, #tpu.memory_space<vmem>>, vector<16x64xf32>
    %cst_8 = arith.constant dense<0.000000e+00> : vector<16xf32>
    %11 = vector.multi_reduction <add>, %8, %cst_8 [1] : vector<16x16xf32> to vector<16xf32>
    %12 = vector.shape_cast %11 : vector<16xf32> to vector<16x1xf32>
    %cst_9 = arith.constant 0.000000e+00 : f32
    %13 = vector.broadcast %cst_9 : f32 to vector<16x1xf32>
    %14 = arith.cmpf ogt, %12, %13 : vector<16x1xf32>
    %15 = math.rsqrt %12 : vector<16x1xf32>
    %cst_10 = arith.constant 0.000000e+00 : f32
    %16 = vector.broadcast %cst_10 : f32 to vector<16x1xf32>
    %17 = arith.select %14, %15, %16 : vector<16x1xi1>, vector<16x1xf32>
    %18 = vector.broadcast %17 : vector<16x1xf32> to vector<16x64xf32>
    %19 = arith.mulf %18, %10 : vector<16x64xf32>
    %cst_11 = arith.constant dense<0.000000e+00> : vector<16x64xf32>
    %20 = tpu.matmul %8, %19, %cst_11 {dimension_numbers = #tpu.dot_dimension_numbers<[1], [0], [0], [1], [0, 0, 1, 1], [], []>} : vector<16x16xf32>, vector<16x64xf32>, vector<16x64xf32> -> vector<16x64xf32>
    %21 = vector.broadcast %17 : vector<16x1xf32> to vector<16x64xf32>
    %22 = arith.mulf %21, %20 : vector<16x64xf32>
    %23 = arith.subf %10, %22 : vector<16x64xf32>
    %24 = math.absf %23 : vector<16x64xf32>
    %cst_12 = arith.constant dense<0.000000e+00> : vector<16xf32>
    %25 = vector.multi_reduction <add>, %24, %cst_12 [1] : vector<16x64xf32> to vector<16xf32>
    %26 = vector.shape_cast %25 : vector<16xf32> to vector<16x1xf32>
    %27 = vector.shape_cast %26 : vector<16x1xf32> to vector<16x1xf32>
    %28 = vector.broadcast %27 : vector<16x1xf32> to vector<16x128xf32>
    %c0_13 = arith.constant 0 : index
    %c0_14 = arith.constant 0 : index
    %29 = vector.load %arg8[%c0_13, %c0_14] : memref<16x128xf32, #tpu.memory_space<vmem>>, vector<16x128xf32>
    tpu.vector_store %arg8[%c0_13, %c0_14], %28 {strides = array<i32>} : memref<16x128xf32, #tpu.memory_space<vmem>>, vector<16x128xf32>,
    %30 = tpu.iota {dimensions = array<i32: 0>} : vector<16x16xi32>
    %31 = tpu.iota {dimensions = array<i32: 1>} : vector<16x16xi32>
    %32 = arith.cmpi eq, %30, %31 : vector<16x16xi32>
    %33 = arith.extui %32 : vector<16x16xi1> to vector<16x16xi32>
    %34 = arith.sitofp %33 : vector<16x16xi32> to vector<16x16xf32>
    %35 = vector.shape_cast %26 : vector<16x1xf32> to vector<16x1xf32>
    %36 = vector.broadcast %35 : vector<16x1xf32> to vector<16x16xf32>
    %cst_15 = arith.constant 1.000000e+00 : f32
    %37 = vector.broadcast %cst_15 : f32 to vector<16x16xf32>
    %38 = arith.mulf %34, %36 : vector<16x16xf32>
    %cst_16 = arith.constant dense<0.000000e+00> : vector<16x16xf32>
    %39 = tpu.matmul %37, %38, %cst_16 {dimension_numbers = #tpu.dot_dimension_numbers<[1], [0], [0], [1], [0, 0, 1, 1], [], []>} : vector<16x16xf32>, vector<16x16xf32>, vector<16x16xf32> -> vector<16x16xf32>
    %40 = arith.cmpf ogt, %39, %36 : vector<16x16xf32>
    %41 = arith.extui %40 : vector<16x16xi1> to vector<16x16xi32>
    %42 = arith.sitofp %41 : vector<16x16xi32> to vector<16x16xf32>
    %43 = arith.cmpf oeq, %39, %36 : vector<16x16xf32>
    %44 = arith.cmpi slt, %31, %30 : vector<16x16xi32>
    %45 = arith.andi %43, %44 : vector<16x16xi1>
    %46 = arith.extui %45 : vector<16x16xi1> to vector<16x16xi32>
    %47 = arith.sitofp %46 : vector<16x16xi32> to vector<16x16xf32>
    %48 = arith.addf %42, %47 : vector<16x16xf32>
    %cst_17 = arith.constant dense<0.000000e+00> : vector<16xf32>
    %49 = vector.multi_reduction <add>, %48, %cst_17 [1] : vector<16x16xf32> to vector<16xf32>
    %50 = vector.shape_cast %49 : vector<16xf32> to vector<16x1xf32>
    %51 = vector.shape_cast %50 : vector<16x1xf32> to vector<16x1xf32>
    %52 = vector.broadcast %51 : vector<16x1xf32> to vector<16x16xf32>
    %cst_18 = arith.constant 1.000000e+00 : f32
    %53 = vector.broadcast %cst_18 : f32 to vector<13x16xf32>
    %54 = arith.mulf %34, %52 : vector<16x16xf32>
    %cst_19 = arith.constant dense<0.000000e+00> : vector<13x16xf32>
    %55 = tpu.matmul %53, %54, %cst_19 {dimension_numbers = #tpu.dot_dimension_numbers<[1], [0], [0], [1], [0, 0, 1, 1], [], []>} : vector<13x16xf32>, vector<16x16xf32>, vector<13x16xf32> -> vector<13x16xf32>
    %56 = tpu.iota {dimensions = array<i32: 0>} : vector<13x16xi32>
    %57 = arith.sitofp %56 : vector<13x16xi32> to vector<13x16xf32>
    %58 = arith.cmpf oeq, %55, %57 : vector<13x16xf32>
    %59 = arith.extui %58 : vector<13x16xi1> to vector<13x16xi32>
    %60 = arith.sitofp %59 : vector<13x16xi32> to vector<13x16xf32>
    %cst_20 = arith.constant dense<0.000000e+00> : vector<13x64xf32>
    %61 = tpu.matmul %60, %10, %cst_20 {dimension_numbers = #tpu.dot_dimension_numbers<[1], [0], [0], [1], [0, 0, 1, 1], [], []>} : vector<13x16xf32>, vector<16x64xf32>, vector<13x64xf32> -> vector<13x64xf32>
    %cst_21 = arith.constant dense<0.000000e+00> : vector<16x64xf32>
    %62 = tpu.matmul %8, %10, %cst_21 {dimension_numbers = #tpu.dot_dimension_numbers<[1], [0], [0], [1], [0, 0, 1, 1], [], []>} : vector<16x16xf32>, vector<16x64xf32>, vector<16x64xf32> -> vector<16x64xf32>
    %cst_22 = arith.constant dense<0.000000e+00> : vector<13x64xf32>
    %63 = tpu.matmul %60, %62, %cst_22 {dimension_numbers = #tpu.dot_dimension_numbers<[1], [0], [0], [1], [0, 0, 1, 1], [], []>} : vector<13x16xf32>, vector<16x64xf32>, vector<13x64xf32> -> vector<13x64xf32>
    %c0_23 = arith.constant 0 : index
    %c0_24 = arith.constant 0 : index
    %64 = vector.load %arg3[%c0_23, %c0_24] : memref<64x64xf32, #tpu.memory_space<vmem>>, vector<64x64xf32>
    %cst_25 = arith.constant dense<0.000000e+00> : vector<13x64xf32>
    %65 = tpu.matmul %61, %64, %cst_25 {dimension_numbers = #tpu.dot_dimension_numbers<[1], [0], [0], [1], [0, 0, 1, 1], [], []>} : vector<13x64xf32>, vector<64x64xf32>, vector<13x64xf32> -> vector<13x64xf32>
    %c0_26 = arith.constant 0 : index
    %c0_27 = arith.constant 0 : index
    %66 = vector.load %arg4[%c0_26, %c0_27] : memref<64x64xf32, #tpu.memory_space<vmem>>, vector<64x64xf32>
    %cst_28 = arith.constant dense<0.000000e+00> : vector<13x64xf32>
    %67 = tpu.matmul %63, %66, %cst_28 {dimension_numbers = #tpu.dot_dimension_numbers<[1], [0], [0], [1], [0, 0, 1, 1], [], []>} : vector<13x64xf32>, vector<64x64xf32>, vector<13x64xf32> -> vector<13x64xf32>
    %68 = arith.addf %65, %67 : vector<13x64xf32>
    %c0_29 = arith.constant 0 : index
    %c0_30 = arith.constant 0 : index
    %69 = vector.load %arg5[%c0_29, %c0_30] : memref<1x64xf32, #tpu.memory_space<vmem>>, vector<1x64xf32>
    %70 = vector.broadcast %69 : vector<1x64xf32> to vector<13x64xf32>
    %71 = arith.addf %68, %70 : vector<13x64xf32>
    %cst_31 = arith.constant 0.000000e+00 : f32
    %72 = vector.broadcast %cst_31 : f32 to vector<13x64xf32>
    %73 = arith.maximumf %71, %72 : vector<13x64xf32>
    %c0_32 = arith.constant 0 : index
    %c0_33 = arith.constant 0 : index
    %74 = vector.load %arg6[%c0_32, %c0_33] : memref<13x64xf32, #tpu.memory_space<vmem>>, vector<13x64xf32>
    tpu.vector_store %arg6[%c0_32, %c0_33], %73 {strides = array<i32>} : memref<13x64xf32, #tpu.memory_space<vmem>>, vector<13x64xf32>,
    return
  }
}

</mosaic_0001>

<llo_original>
// kernel: forward.2
$region0: #{forward.2}
  #allocation0 [shape = 'u32[]', space=smem, size = 0x4, offset = 0x4, fixed_abs, tag = 'smem constant byte address 0x4 - core index']
  #allocation1 [shape = 'u32[72,128]{1,0:T(1,128)}', space=vmem, size = 0x9000, scoped, tag = 'internal scratch']
  %s0 = inlined_call_operand.hbm [shape: f32[1,3], index: 0, kind: input, shape index: {}]
  %s1 = inlined_call_operand.hbm [shape: f32[16,16], index: 1, kind: input, shape index: {}]
  %s2 = inlined_call_operand.hbm [shape: f32[16,64], index: 2, kind: input, shape index: {}]
  %s3 = inlined_call_operand.hbm [shape: f32[64,128], index: 3, kind: input, shape index: {}]
  %s4 = inlined_call_operand.hbm [shape: f32[16,16], index: 4, kind: input, shape index: {}, may-alias: {4,5}]
  %s5 = inlined_call_operand.hbm [shape: f32[16,16], index: 5, kind: input, shape index: {}, may-alias: {4,5}]
  %s6 = inlined_call_operand.hbm [shape: f32[16,16], index: 6, kind: input, shape index: {}]
  %s7 = inlined_call_operand.vmem [shape: f32[16,16], index: 7, kind: output, shape index: {}]
  %s8 = sld [smem:[#allocation0]]
  $region66: #{forward.2} parent=0
    _
  %s10 = ssub.s32 1, %s8
  %s11 = scalar_select 0, %s10, %s8
  $region1: #{forward.2} parent=0
    #allocation2 [shape = 'u8[512]{0}', space=smem, size = 0x200, scoped, tag = 'input window, operand 0, single buffered']
    #allocation3 [shape = 's32[1]{0}', space=sflag, size = 0x4, scoped, tag = 'scoped memory for forward.2']
    #allocation4 [shape = 's32[1]{0}', space=sflag, size = 0x4, scoped, tag = 'scoped memory for forward.2']
    #allocation5 [shape = 'u8[8192]{0}', space=vmem, size = 0x2000, scoped, tag = 'input window, operand 1, single buffered']
    #allocation6 [shape = 'u8[8192]{0}', space=vmem, size = 0x2000, scoped, tag = 'input window, operand 2, single buffered']
    #allocation7 [shape = 's32[1]{0}', space=sflag, size = 0x4, scoped, tag = 'scoped memory for forward.2']
    #allocation8 [shape = 'u8[32768]{0}', space=vmem, size = 0x8000, scoped, tag = 'input window, operand 3, single buffered']
    #allocation9 [shape = 'u8[8192]{0}', space=vmem, size = 0x2000, scoped, tag = 'input window, operand 4, single buffered']
    #allocation10 [shape = 's32[1]{0}', space=sflag, size = 0x4, scoped, tag = 'scoped memory for forward.2']
    #allocation11 [shape = 'u8[8192]{0}', space=vmem, size = 0x2000, scoped, tag = 'input window, operand 5, single buffered']
    #allocation12 [shape = 'u8[8192]{0}', space=vmem, size = 0x2000, scoped, tag = 'input window, operand 6, single buffered']
    #allocation13 [shape = 's32[1]{0}', space=sflag, size = 0x4, scoped, tag = 'scoped memory for forward.2']
    %12 = vsyncpa [#allocation4], 0
    %13 = vsyncpa [#allocation3], 0
    %14 = vsyncpa [#allocation7], 0
    %15 = vsyncpa [#allocation10], 0
    %16 = vsyncpa [#allocation13], 0
    // Predicated region
    $region2: #{forward.2} parent=1 // pred_check
      _
    $region3: #{forward.2} parent=1 // pred_check_branch
      %18 = sbr.rel (0) target = $region5
    $region4: #{forward.2} parent=1 // pred_region
      %20 = vsyncadd [#allocation4], 0
      %s22 = sshll.u32 %s0, 4
      %s23 = int_to_ptr.hbm [resolvable:$true] %s22
      %25 = dma.hbm_to_smem %s23, 16, [#allocation2], [#allocation4]
    $region5: #{forward.2} parent=1 // pred_fallthru
      _
    // Predicated region
    $region6: #{forward.2} parent=1 // pred_check
      _
    $region7: #{forward.2} parent=1 // pred_check_branch
      %27 = sbr.rel (0) target = $region9
    $region8: #{forward.2} parent=1 // pred_region
      %29 = vsyncadd [#allocation3], 0
      %s30 = sshll.u32 %s1, 4
      %s31 = int_to_ptr.hbm [resolvable:$true] %s30
      %s32 = sshll.u32 [#allocation5], 4
      %s33 = int_to_ptr.vmem [resolvable:$true] %s32
      %38 = dma.hbm_to_vmem [thread:$0]  %s31, 256, %s33, [#allocation3], 128, 128, 8
    $region9: #{forward.2} parent=1 // pred_fallthru
      _
    // Predicated region
    $region10: #{forward.2} parent=1 // pred_check
      _
    $region11: #{forward.2} parent=1 // pred_check_branch
      %40 = sbr.rel (0) target = $region13
    $region12: #{forward.2} parent=1 // pred_region
      %42 = vsyncadd [#allocation7], 0
      %s43 = sshll.u32 %s2, 4
      %s44 = int_to_ptr.hbm [resolvable:$true] %s43
      %s45 = sshll.u32 [#allocation6], 4
      %s46 = int_to_ptr.vmem [resolvable:$true] %s45
      %51 = dma.hbm_to_vmem [thread:$0]  %s44, 256, %s46, [#allocation7], 128, 128, 8
    $region13: #{forward.2} parent=1 // pred_fallthru
      _
    // Predicated region
    $region14: #{forward.2} parent=1 // pred_check
      _
    $region15: #{forward.2} parent=1 // pred_check_branch
      %53 = sbr.rel (0) target = $region17
    $region16: #{forward.2} parent=1 // pred_region
      %55 = vsyncadd [#allocation7], 0
      %s56 = sshll.u32 %s3, 4
      %s57 = int_to_ptr.hbm [resolvable:$true] %s56
      %s58 = sshll.u32 [#allocation8], 4
      %s59 = int_to_ptr.vmem [resolvable:$true] %s58
      %64 = dma.hbm_to_vmem [thread:$0]  %s57, 1024, %s59, [#allocation7], 128, 128, 8
    $region17: #{forward.2} parent=1 // pred_fallthru
      _
    // Predicated region
    $region18: #{forward.2} parent=1 // pred_check
      _
    $region19: #{forward.2} parent=1 // pred_check_branch
      %66 = sbr.rel (0) target = $region21
    $region20: #{forward.2} parent=1 // pred_region
      %68 = vsyncadd [#allocation10], 0
      %s69 = sshll.u32 %s4, 4
      %s70 = int_to_ptr.hbm [resolvable:$true] %s69
      %s71 = sshll.u32 [#allocation9], 4
      %s72 = int_to_ptr.vmem [resolvable:$true] %s71
      %77 = dma.hbm_to_vmem [thread:$0]  %s70, 256, %s72, [#allocation10], 128, 128, 8
    $region21: #{forward.2} parent=1 // pred_fallthru
      _
    // Predicated region
    $region22: #{forward.2} parent=1 // pred_check
      _
    $region23: #{forward.2} parent=1 // pred_check_branch
      %79 = sbr.rel (0) target = $region25
    $region24: #{forward.2} parent=1 // pred_region
      %81 = vsyncadd [#allocation10], 0
      %s82 = sshll.u32 %s5, 4
      %s83 = int_to_ptr.hbm [resolvable:$true] %s82
      %s84 = sshll.u32 [#allocation11], 4
      %s85 = int_to_ptr.vmem [resolvable:$true] %s84
      %90 = dma.hbm_to_vmem [thread:$0]  %s83, 256, %s85, [#allocation10], 128, 128, 8
    $region25: #{forward.2} parent=1 // pred_fallthru
      _
    // Predicated region
    $region26: #{forward.2} parent=1 // pred_check
      _
    $region27: #{forward.2} parent=1 // pred_check_branch
      %92 = sbr.rel (0) target = $region29
    $region28: #{forward.2} parent=1 // pred_region
      %94 = vsyncadd [#allocation13], 0
      %s95 = sshll.u32 %s6, 4
      %s96 = int_to_ptr.hbm [resolvable:$true] %s95
      %s97 = sshll.u32 [#allocation12], 4
      %s98 = int_to_ptr.vmem [resolvable:$true] %s97
      %103 = dma.hbm_to_vmem [thread:$0]  %s96, 256, %s98, [#allocation13], 128, 128, 8
    $region29: #{forward.2} parent=1 // pred_fallthru
      _
    // Predicated region
    $region30: #{forward.2} parent=1 // pred_check
      _
    $region31: #{forward.2} parent=1 // pred_check_branch
      %105 = sbr.rel (0) target = $region33
    $region32: #{forward.2} parent=1 // pred_region
      %107 = dma.done [#allocation4], 16
    $region33: #{forward.2} parent=1 // pred_fallthru
      _
    // Predicated region
    $region34: #{forward.2} parent=1 // pred_check
      _
    $region35: #{forward.2} parent=1 // pred_check_branch
      %109 = sbr.rel (0) target = $region37
    $region36: #{forward.2} parent=1 // pred_region
      %111 = dma.done [#allocation3], 256
    $region37: #{forward.2} parent=1 // pred_fallthru
      _
    // Predicated region
    $region38: #{forward.2} parent=1 // pred_check
      _
    $region39: #{forward.2} parent=1 // pred_check_branch
      %113 = sbr.rel (0) target = $region41
    $region40: #{forward.2} parent=1 // pred_region
      %115 = dma.done [#allocation7], 256
    $region41: #{forward.2} parent=1 // pred_fallthru
      _
    // Predicated region
    $region42: #{forward.2} parent=1 // pred_check
      _
    $region43: #{forward.2} parent=1 // pred_check_branch
      %117 = sbr.rel (0) target = $region45
    $region44: #{forward.2} parent=1 // pred_region
      %119 = dma.done [#allocation7], 1024
    $region45: #{forward.2} parent=1 // pred_fallthru
      _
    // Predicated region
    $region46: #{forward.2} parent=1 // pred_check
      _
    $region47: #{forward.2} parent=1 // pred_check_branch
      %121 = sbr.rel (0) target = $region49
    $region48: #{forward.2} parent=1 // pred_region
      %123 = dma.done [#allocation10], 256
    $region49: #{forward.2} parent=1 // pred_fallthru
      _
    // Predicated region
    $region50: #{forward.2} parent=1 // pred_check
      _
    $region51: #{forward.2} parent=1 // pred_check_branch
      %125 = sbr.rel (0) target = $region53
    $region52: #{forward.2} parent=1 // pred_region
      %127 = dma.done [#allocation10], 256
    $region53: #{forward.2} parent=1 // pred_fallthru
      _
    // Predicated region
    $region54: #{forward.2} parent=1 // pred_check
      _
    $region55: #{forward.2} parent=1 // pred_check_branch
      %129 = sbr.rel (0) target = $region57
    $region56: #{forward.2} parent=1 // pred_region
      %131 = dma.done [#allocation13], 256
    $region57: #{forward.2} parent=1 // pred_fallthru
      _
    %132 = sfence
    %v133 = vld [vmem:[#allocation6] sm:$0xff]
    %v134 = vld [vmem:[#allocation6 + $0x8] sm:$0xff]
    %s135 = sld [smem:[#allocation2]]
    %v136 = vstv %s135
    %v137 = vmul.f32 %v133, %v136
    %v138 = vmul.f32 %v134, %v136
    %v139 = vld [vmem:[#allocation5] sm:$0xff]
    %v140 = vld [vmem:[#allocation5 + $0x8] sm:$0xff]
    %vm141 = vcmask 130048
    %v143 = vsel %vm141, %v139, 0
    %v146 = vsel %vm141, %v140, 0
    %148 = vmatpush.msra.mxu0 0.0
    %149 = vmatpush.msra.mxu0 0.0
    %150 = vmatpush.msra.mxu0 0.0
    %151 = vmatpush.msra.mxu0 0.0
    %152 = vmatpush.msra.mxu0 0.0
    %153 = vmatpush.msra.mxu0 0.0
    %154 = vmatpush.msra.mxu0 0.0
    %155 = vmatpush.msra.mxu0 0.0
    %156 = vmatpush.msra.mxu0 0.0
    %157 = vmatpush.msra.mxu0 0.0
    %158 = vmatpush.msra.mxu0 0.0
    %159 = vmatpush.msra.mxu0 0.0
    %160 = vmatpush.msra.mxu0 0.0
    %161 = vmatpush.msra.mxu0 0.0
    %162 = vmatpush.msra.mxu0 %v134
    %163 = vmatpush.msra.mxu0 %v133
    %164 = vmatmul.f32.gmra.mxu0 %v143
    %v165 = vpop.f32.mrf.mxu0
    %v166 = vadd.f32 0.0, %v165
    %167 = vmatmul.f32.gmra.mxu0 %v146
    %v168 = vpop.f32.mrf.mxu0
    %v169 = vadd.f32 0.0, %v168
    %170 = vdwg.mxu0
    %s171 = sld [smem:[#allocation2 + $0x1]]
    %v172 = vstv %s171
    %v173 = vmul.f32 %v172, %v166
    %v174 = vmul.f32 %v172, %v169
    %v175 = vadd.f32 %v137, %v173
    %v176 = vadd.f32 %v138, %v174
    %177 = vmatpush.msra.mxu0 0.0
    %178 = vmatpush.msra.mxu0 0.0
    %179 = vmatpush.msra.mxu0 0.0
    %180 = vmatpush.msra.mxu0 0.0
    %181 = vmatpush.msra.mxu0 0.0
    %182 = vmatpush.msra.mxu0 0.0
    %183 = vmatpush.msra.mxu0 0.0
    %184 = vmatpush.msra.mxu0 0.0
    %185 = vmatpush.msra.mxu0 0.0
    %186 = vmatpush.msra.mxu0 0.0
    %187 = vmatpush.msra.mxu0 0.0
    %188 = vmatpush.msra.mxu0 0.0
    %189 = vmatpush.msra.mxu0 0.0
    %190 = vmatpush.msra.mxu0 0.0
    %191 = vmatpush.msra.mxu0 %v169
    %192 = vmatpush.msra.mxu0 %v166
    %193 = vmatmul.f32.gmra.mxu0 %v143
    %v194 = vpop.f32.mrf.mxu0
    %v195 = vadd.f32 0.0, %v194
    %196 = vmatmul.f32.gmra.mxu0 %v146
    %v197 = vpop.f32.mrf.mxu0
    %v198 = vadd.f32 0.0, %v197
    %199 = vdwg.mxu0
    %s200 = sld [smem:[#allocation2 + $0x2]]
    %v201 = vstv %s200
    %v202 = vmul.f32 %v201, %v195
    %v203 = vmul.f32 %v201, %v198
    %v204 = vadd.f32 %v175, %v202
    %v205 = vadd.f32 %v176, %v203
    %v206 = vld [vmem:[#allocation8] sm:$0xff]
    %v207 = vld [vmem:[#allocation8 + $0x8] sm:$0xff]
    %v208 = vld [vmem:[#allocation8 + $0x10] sm:$0xff]
    %v209 = vld [vmem:[#allocation8 + $0x18] sm:$0xff]
    %v210 = vld [vmem:[#allocation8 + $0x20] sm:$0xff]
    %v211 = vld [vmem:[#allocation8 + $0x28] sm:$0xff]
    %v212 = vld [vmem:[#allocation8 + $0x30] sm:$0xff]
    %v213 = vld [vmem:[#allocation8 + $0x38] sm:$0xff]
    %vm214 = vcmask 523264
    %v216 = vsel %vm214, %v204, 0
    %v219 = vsel %vm214, %v205, 0
    %221 = vmatpush.msra.mxu0 0.0
    %222 = vmatpush.msra.mxu0 0.0
    %223 = vmatpush.msra.mxu0 0.0
    %224 = vmatpush.msra.mxu0 0.0
    %225 = vmatpush.msra.mxu0 0.0
    %226 = vmatpush.msra.mxu0 0.0
    %227 = vmatpush.msra.mxu0 0.0
    %228 = vmatpush.msra.mxu0 0.0
    %229 = vmatpush.msra.mxu0 %v213
    %230 = vmatpush.msra.mxu0 %v212
    %231 = vmatpush.msra.mxu0 %v211
    %232 = vmatpush.msra.mxu0 %v210
    %233 = vmatpush.msra.mxu0 %v209
    %234 = vmatpush.msra.mxu0 %v208
    %235 = vmatpush.msra.mxu0 %v207
    %236 = vmatpush.msra.mxu0 %v206
    %237 = vmatmul.f32.gmra.mxu0 %v216
    %v238 = vpop.f32.mrf.mxu0
    %v239 = vadd.f32 0.0, %v238
    %240 = vmatmul.f32.gmra.mxu0 %v219
    %v241 = vpop.f32.mrf.mxu0
    %v242 = vadd.f32 0.0, %v241
    %243 = vdwg.mxu0
    %v244 = vlaneseq
    %v245 = vshrl.u32 %v244, 7
    %v246 = vadd.s32 %v245, 8
    %v247 = vlaneseq
    %v248 = vand.u32 %v247, 127
    %vm249 = vcmp.eq.s32.totalorder %v245, %v248
    %vm250 = vcmp.eq.s32.totalorder %v246, %v248
    %v251 = vsel %vm249, 1, 0
    %v252 = vsel %vm250, 1, 0
    %v253 = vcvt.s32.f32 %v251
    %v254 = vcvt.s32.f32 %v252
    %256 = vset.pattern.permute.xlu0 0
    %257 = vperm.xlu0 %256, %v239
    %v258 = vpop.permute.xlu0 %257
    %261 = vset.pattern.permute.xlu0 0
    %262 = vperm.xlu0 %261, %v242
    %v263 = vpop.permute.xlu0 %262
    %265 = vset.pattern.permute.xlu0 1
    %266 = vperm.xlu0 %265, %v239
    %v267 = vpop.permute.xlu0 %266
    %269 = vset.pattern.permute.xlu0 1
    %270 = vperm.xlu0 %269, %v242
    %v271 = vpop.permute.xlu0 %270
    %v273 = vmul.f32 %v253, %v258
    %v274 = vmul.f32 %v254, %v263
    %v276 = vsel %vm141, 1.0, 0
    %278 = vmatpush.msra.mxu0 0.0
    %279 = vmatpush.msra.mxu0 0.0
    %280 = vmatpush.msra.mxu0 0.0
    %281 = vmatpush.msra.mxu0 0.0
    %282 = vmatpush.msra.mxu0 0.0
    %283 = vmatpush.msra.mxu0 0.0
    %284 = vmatpush.msra.mxu0 0.0
    %285 = vmatpush.msra.mxu0 0.0
    %286 = vmatpush.msra.mxu0 0.0
    %287 = vmatpush.msra.mxu0 0.0
    %288 = vmatpush.msra.mxu0 0.0
    %289 = vmatpush.msra.mxu0 0.0
    %290 = vmatpush.msra.mxu0 0.0
    %291 = vmatpush.msra.mxu0 0.0
    %292 = vmatpush.msra.mxu0 %v274
    %293 = vmatpush.msra.mxu0 %v273
    %294 = vmatmul.f32.gmra.mxu0 %v276
    %v295 = vpop.f32.mrf.mxu0
    %v296 = vadd.f32 0.0, %v295
    %297 = vmatmul.f32.gmra.mxu0 %v276
    %v298 = vpop.f32.mrf.mxu0
    %v299 = vadd.f32 0.0, %v298
    %300 = vdwg.mxu0
    %v301 = vmul.f32 %v253, %v267
    %v302 = vmul.f32 %v254, %v271
    %303 = vmatpush.msra.mxu0 0.0
    %304 = vmatpush.msra.mxu0 0.0
    %305 = vmatpush.msra.mxu0 0.0
    %306 = vmatpush.msra.mxu0 0.0
    %307 = vmatpush.msra.mxu0 0.0
    %308 = vmatpush.msra.mxu0 0.0
    %309 = vmatpush.msra.mxu0 0.0
    %310 = vmatpush.msra.mxu0 0.0
    %311 = vmatpush.msra.mxu0 0.0
    %312 = vmatpush.msra.mxu0 0.0
    %313 = vmatpush.msra.mxu0 0.0
    %314 = vmatpush.msra.mxu0 0.0
    %315 = vmatpush.msra.mxu0 0.0
    %316 = vmatpush.msra.mxu0 0.0
    %317 = vmatpush.msra.mxu0 %v302
    %318 = vmatpush.msra.mxu0 %v301
    %319 = vmatmul.f32.gmra.mxu0 %v276
    %v320 = vpop.f32.mrf.mxu0
    %v321 = vadd.f32 0.0, %v320
    %322 = vmatmul.f32.gmra.mxu0 %v276
    %v323 = vpop.f32.mrf.mxu0
    %v324 = vadd.f32 0.0, %v323
    %325 = vdwg.mxu0
    %v326 = vadd.f32 %v258, %v321
    %v327 = vadd.f32 %v263, %v324
    %v328 = vsub.f32 0.0, %v326
    %v329 = vsub.f32 0.0, %v327
    %v330 = vmul.f32 %v328, 1.442695
    %v331 = vpow.pop %v330
    %v332 = vmul.f32 %v329, 1.442695
    %v333 = vpow.pop %v332
    %v334 = vadd.f32 %v331, 1.0
    %v335 = vadd.f32 %v333, 1.0
    %v336 = vrcp.pop %v334
    %v337 = vmul.f32 %v334, %v336
    %v338 = vsub.f32 1.0, %v337
    %v339 = vmul.f32 %v336, %v338
    %v340 = vadd.f32 %v336, %v339
    %vm341 = vweird.f32 %v334
    %vm342 = vweird.f32 %v336
    %vm343 = vmor %vm341, %vm342
    %v344 = vsel %vm343, %v336, %v340
    %v345 = vand.u32 2147483647, %v334
    %vm346 = vcmp.eq.f32.partialorder %v345, 8.507059e+37
    %v347 = vand.u32 %v334, 2147483648
    %v348 = vor.u32 1.1754944e-38, %v347
    %v349 = vsel %vm346, %v348, %v344
    %v350 = vmul.f32 1.0, %v349
    %v351 = vrcp.pop %v335
    %v352 = vmul.f32 %v335, %v351
    %v353 = vsub.f32 1.0, %v352
    %v354 = vmul.f32 %v351, %v353
    %v355 = vadd.f32 %v351, %v354
    %vm356 = vweird.f32 %v335
    %vm357 = vweird.f32 %v351
    %vm358 = vmor %vm356, %vm357
    %v359 = vsel %vm358, %v351, %v355
    %v360 = vand.u32 2147483647, %v335
    %vm361 = vcmp.eq.f32.partialorder %v360, 8.507059e+37
    %v362 = vand.u32 %v335, 2147483648
    %v363 = vor.u32 1.1754944e-38, %v362
    %v364 = vsel %vm361, %v363, %v359
    %v365 = vmul.f32 1.0, %v364
    %v366 = vadd.f32 %v267, %v296
    %v367 = vadd.f32 %v271, %v299
    %v368 = vsub.f32 0.0, %v366
    %v369 = vsub.f32 0.0, %v367
    %v370 = vmul.f32 %v368, 1.442695
    %v371 = vpow.pop %v370
    %v372 = vmul.f32 %v369, 1.442695
    %v373 = vpow.pop %v372
    %v374 = vadd.f32 %v371, 1.0
    %v375 = vadd.f32 %v373, 1.0
    %v376 = vrcp.pop %v374
    %v377 = vmul.f32 %v374, %v376
    %v378 = vsub.f32 1.0, %v377
    %v379 = vmul.f32 %v376, %v378
    %v380 = vadd.f32 %v376, %v379
    %vm381 = vweird.f32 %v374
    %vm382 = vweird.f32 %v376
    %vm383 = vmor %vm381, %vm382
    %v384 = vsel %vm383, %v376, %v380
    %v385 = vand.u32 2147483647, %v374
    %vm386 = vcmp.eq.f32.partialorder %v385, 8.507059e+37
    %v387 = vand.u32 %v374, 2147483648
    %v388 = vor.u32 1.1754944e-38, %v387
    %v389 = vsel %vm386, %v388, %v384
    %v390 = vmul.f32 1.0, %v389
    %v391 = vrcp.pop %v375
    %v392 = vmul.f32 %v375, %v391
    %v393 = vsub.f32 1.0, %v392
    %v394 = vmul.f32 %v391, %v393
    %v395 = vadd.f32 %v391, %v394
    %vm396 = vweird.f32 %v375
    %vm397 = vweird.f32 %v391
    %vm398 = vmor %vm396, %vm397
    %v399 = vsel %vm398, %v391, %v395
    %v400 = vand.u32 2147483647, %v375
    %vm401 = vcmp.eq.f32.partialorder %v400, 8.507059e+37
    %v402 = vand.u32 %v375, 2147483648
    %v403 = vor.u32 1.1754944e-38, %v402
    %v404 = vsel %vm401, %v403, %v399
    %v405 = vmul.f32 1.0, %v404
    %v406 = vld [vmem:[#allocation12] sm:$0xff]
    %v407 = vld [vmem:[#allocation12 + $0x8] sm:$0xff]
    %v408 = vld [vmem:[#allocation9] sm:$0xff]
    %v409 = vld [vmem:[#allocation9 + $0x8] sm:$0xff]
    %v410 = vmul.f32 %v408, %v350
    %v411 = vmul.f32 %v409, %v365
    %v412 = vld [vmem:[#allocation11] sm:$0xff]
    %v413 = vld [vmem:[#allocation11 + $0x8] sm:$0xff]
    %v414 = vmul.f32 %v412, %v390
    %v415 = vmul.f32 %v413, %v405
    %v416 = vadd.f32 %v410, %v414
    %v417 = vadd.f32 %v411, %v415
    %v418 = vmul.f32 %v253, 2.0
    %v419 = vmul.f32 %v254, 2.0
    %v420 = vadd.f32 %v416, %v418
    %v421 = vadd.f32 %v417, %v419
    %vm422 = vcmp.gt.f32.partialorder %v406, 0.0
    %vm423 = vcmp.gt.f32.partialorder %v407, 0.0
    %v424 = vmax.f32 %v406, 1.0
    %v425 = vmax.f32 %v407, 1.0
    %v426 = vrcp.pop %v424
    %v427 = vmul.f32 %v424, %v426
    %v428 = vsub.f32 1.0, %v427
    %v429 = vmul.f32 %v426, %v428
    %v430 = vadd.f32 %v426, %v429
    %vm431 = vweird.f32 %v424
    %vm432 = vweird.f32 %v426
    %vm433 = vmor %vm431, %vm432
    %v434 = vsel %vm433, %v426, %v430
    %v435 = vand.u32 2147483647, %v424
    %vm436 = vcmp.eq.f32.partialorder %v435, 8.507059e+37
    %v437 = vand.u32 %v424, 2147483648
    %v438 = vor.u32 1.1754944e-38, %v437
    %v439 = vsel %vm436, %v438, %v434
    %v440 = vmul.f32 %v420, %v439
    %v441 = vrcp.pop %v425
    %v442 = vmul.f32 %v425, %v441
    %v443 = vsub.f32 1.0, %v442
    %v444 = vmul.f32 %v441, %v443
    %v445 = vadd.f32 %v441, %v444
    %vm446 = vweird.f32 %v425
    %vm447 = vweird.f32 %v441
    %vm448 = vmor %vm446, %vm447
    %v449 = vsel %vm448, %v441, %v445
    %v450 = vand.u32 2147483647, %v425
    %vm451 = vcmp.eq.f32.partialorder %v450, 8.507059e+37
    %v452 = vand.u32 %v425, 2147483648
    %v453 = vor.u32 1.1754944e-38, %v452
    %v454 = vsel %vm451, %v453, %v449
    %v455 = vmul.f32 %v421, %v454
    %v456 = vsel %vm422, %v440, 0.0
    %v457 = vsel %vm423, %v455, 0.0
    %458 = vst.msk [vmem:[%s7] sm:$0xff] %vm141, %v456
    %459 = vst.msk [vmem:[%s7 + $0x8] sm:$0xff] %vm141, %v457
    // Predicated region
    $region58: #{forward.2} parent=1 // pred_check
      _
    $region59: #{forward.2} parent=1 // pred_check_branch
      %461 = sbr.rel (0) target = $region61
    $region60: #{forward.2} parent=1 // pred_region
      _
    $region61: #{forward.2} parent=1 // pred_fallthru
      _
    // Predicated region
    $region62: #{forward.2} parent=1 // pred_check
      _
    $region63: #{forward.2} parent=1 // pred_check_branch
      %463 = sbr.rel (0) target = $region65
    $region64: #{forward.2} parent=1 // pred_region
      _
    $region65: #{forward.2} parent=1 // pred_fallthru
      _
    %464 = vsyncpa [#allocation3], 1
    %465 = vsyncpa [#allocation7], 1
    %466 = vsyncpa [#allocation10], 1
    %467 = vsyncpa [#allocation13], 1
    %468 = vsyncpa [#allocation4], 1

// kernel: forward.3
$region0: #{forward.3}
  #allocation0 [shape = 'u32[]', space=smem, size = 0x4, offset = 0x4, fixed_abs, tag = 'smem constant byte address 0x4 - core index']
  #allocation1 [shape = 'u32[72,128]{1,0:T(1,128)}', space=vmem, size = 0x9000, scoped, tag = 'internal scratch']
  #allocation2 [shape = 'f32[1,1]{1,0:T(1,128)S(6)}', space=smem, size = 0x200, scoped, tag = 'scoped memory for forward.3']
  %s0 = inlined_call_operand.<no memory space> [shape: f32[1,1], index: 0, kind: input, shape index: {}]
  %s1 = inlined_call_operand.vmem [shape: f32[16,16], index: 1, kind: input, shape index: {}]
  %s2 = inlined_call_operand.vmem [shape: f32[16,64], index: 2, kind: input, shape index: {}]
  %s3 = inlined_call_operand.vmem [shape: f32[64,64], index: 3, kind: input, shape index: {}]
  %s4 = inlined_call_operand.vmem [shape: f32[64,64], index: 4, kind: input, shape index: {}]
  %s5 = inlined_call_operand.vmem [shape: f32[1,64], index: 5, kind: input, shape index: {}]
  %s6 = inlined_call_operand.hbm [shape: f32[13,64], index: 6, kind: output, shape index: {0}]
  %s7 = inlined_call_operand.hbm [shape: f32[16,16], index: 7, kind: output, shape index: {1}]
  %s8 = inlined_call_operand.vmem [shape: f32[16,128], index: 8, kind: output, shape index: {2}]
  %9 = xla_tuple %s6, %s7, %s8
  %s10 = sld [smem:[#allocation0]]
  $region50: #{forward.3} parent=0
    _
  %s12 = ssub.s32 1, %s10
  %s13 = scalar_select 0, %s12, %s10
  %14 = sst [smem:[#allocation2]] %s0
  $region1: #{forward.3} parent=0
    #allocation3 [shape = 'u8[8192]{0}', space=vmem, size = 0x2000, scoped, tag = 'output window, operand 0, single buffered']
    #allocation4 [shape = 's32[1]{0}', space=sflag, size = 0x4, scoped, tag = 'scoped memory for forward.3']
    #allocation5 [shape = 'u8[8192]{0}', space=vmem, size = 0x2000, scoped, tag = 'output window, operand 1, single buffered']
    #allocation6 [shape = 's32[1]{0}', space=sflag, size = 0x4, scoped, tag = 'scoped memory for forward.3']
    %15 = vsyncpa [#allocation4], 0
    %16 = vsyncpa [#allocation6], 0
    // Predicated region
    $region2: #{forward.3} parent=1 // pred_check
      _
    $region3: #{forward.3} parent=1 // pred_check_branch
      %18 = sbr.rel (0) target = $region5
    $region4: #{forward.3} parent=1 // pred_region
      _
    $region5: #{forward.3} parent=1 // pred_fallthru
      _
    // Predicated region
    $region6: #{forward.3} parent=1 // pred_check
      _
    $region7: #{forward.3} parent=1 // pred_check_branch
      %20 = sbr.rel (0) target = $region9
    $region8: #{forward.3} parent=1 // pred_region
      _
    $region9: #{forward.3} parent=1 // pred_fallthru
      _
    // Predicated region
    $region10: #{forward.3} parent=1 // pred_check
      _
    $region11: #{forward.3} parent=1 // pred_check_branch
      %22 = sbr.rel (0) target = $region13
    $region12: #{forward.3} parent=1 // pred_region
      _
    $region13: #{forward.3} parent=1 // pred_fallthru
      _
    // Predicated region
    $region14: #{forward.3} parent=1 // pred_check
      _
    $region15: #{forward.3} parent=1 // pred_check_branch
      %24 = sbr.rel (0) target = $region17
    $region16: #{forward.3} parent=1 // pred_region
      _
    $region17: #{forward.3} parent=1 // pred_fallthru
      _
    // Predicated region
    $region18: #{forward.3} parent=1 // pred_check
      _
    $region19: #{forward.3} parent=1 // pred_check_branch
      %26 = sbr.rel (0) target = $region21
    $region20: #{forward.3} parent=1 // pred_region
      _
    $region21: #{forward.3} parent=1 // pred_fallthru
      _
    // Predicated region
    $region22: #{forward.3} parent=1 // pred_check
      _
    $region23: #{forward.3} parent=1 // pred_check_branch
      %28 = sbr.rel (0) target = $region25
    $region24: #{forward.3} parent=1 // pred_region
      _
    $region25: #{forward.3} parent=1 // pred_fallthru
      _
    %s29 = sld [smem:[#allocation2]]
    %v30 = vld [vmem:[%s1] sm:$0xff]
    %v31 = vld [vmem:[%s1 + $0x8] sm:$0xff]
    %v32 = vstv %s29
    %vm33 = vcmp.ge.f32.partialorder %v30, %v32
    %vm34 = vcmp.ge.f32.partialorder %v31, %v32
    %vm35 = vcmp.gt.f32.partialorder %v30, 0.0
    %vm36 = vcmp.gt.f32.partialorder %v31, 0.0
    %vm37 = vmand %vm33, %vm35
    %vm38 = vmand %vm34, %vm36
    %v39 = vsel %vm37, %v30, 0.0
    %v40 = vsel %vm38, %v31, 0.0
    %vm41 = vcmask 130048
    %42 = vst.msk [vmem:[#allocation5] sm:$0xff] %vm41, %v39
    %43 = vst.msk [vmem:[#allocation5 + $0x8] sm:$0xff] %vm41, %v40
    %v44 = vld [vmem:[%s2] sm:$0xff]
    %v45 = vld [vmem:[%s2 + $0x8] sm:$0xff]
    %v46 = vsel %vm41, %v39, 0.0
    %47 = vadd.xlane.f32.xlu0 %v46
    %v48 = vpop.xlane.xlu0 %47
    %v49 = vsel %vm41, %v40, 0.0
    %50 = vadd.xlane.f32.xlu0 %v49
    %v51 = vpop.xlane.xlu0 %50
    %vm52 = vcmp.gt.f32.partialorder %v48, 0.0
    %vm53 = vcmp.gt.f32.partialorder %v51, 0.0
    %v54 = vrsqrt.pop %v48
    %v55 = vmul.f32 %v54, %v48
    %v56 = vmul.f32 %v55, %v54
    %v57 = vmul.f32 0.5, %v56
    %v58 = vsub.f32 1.5, %v57
    %v59 = vmul.f32 %v54, %v58
    %vm60 = vweird.f32 %v48
    %vm61 = vweird.f32 %v54
    %vm62 = vmor %vm60, %vm61
    %v63 = vsel %vm62, %v54, %v59
    %v64 = vrsqrt.pop %v51
    %v65 = vmul.f32 %v64, %v51
    %v66 = vmul.f32 %v65, %v64
    %v67 = vmul.f32 0.5, %v66
    %v68 = vsub.f32 1.5, %v67
    %v69 = vmul.f32 %v64, %v68
    %vm70 = vweird.f32 %v51
    %vm71 = vweird.f32 %v64
    %vm72 = vmor %vm70, %vm71
    %v73 = vsel %vm72, %v64, %v69
    %v74 = vsel %vm52, %v63, 0.0
    %v75 = vsel %vm53, %v73, 0.0
    %v76 = vmul.f32 %v74, %v44
    %v77 = vmul.f32 %v75, %v45
    %v79 = vsel %vm41, %v39, 0
    %v82 = vsel %vm41, %v40, 0
    %84 = vmatpush.msra.mxu0 0.0
    %85 = vmatpush.msra.mxu0 0.0
    %86 = vmatpush.msra.mxu0 0.0
    %87 = vmatpush.msra.mxu0 0.0
    %88 = vmatpush.msra.mxu0 0.0
    %89 = vmatpush.msra.mxu0 0.0
    %90 = vmatpush.msra.mxu0 0.0
    %91 = vmatpush.msra.mxu0 0.0
    %92 = vmatpush.msra.mxu0 0.0
    %93 = vmatpush.msra.mxu0 0.0
    %94 = vmatpush.msra.mxu0 0.0
    %95 = vmatpush.msra.mxu0 0.0
    %96 = vmatpush.msra.mxu0 0.0
    %97 = vmatpush.msra.mxu0 0.0
    %98 = vmatpush.msra.mxu0 %v77
    %99 = vmatpush.msra.mxu0 %v76
    %100 = vmatmul.f32.gmra.mxu0 %v79
    %v101 = vpop.f32.mrf.mxu0
    %v102 = vadd.f32 0.0, %v101
    %103 = vmatmul.f32.gmra.mxu0 %v82
    %v104 = vpop.f32.mrf.mxu0
    %v105 = vadd.f32 0.0, %v104
    %106 = vdwg.mxu0
    %v107 = vmul.f32 %v74, %v102
    %v108 = vmul.f32 %v75, %v105
    %v109 = vsub.f32 %v44, %v107
    %v110 = vsub.f32 %v45, %v108
    %v111 = vand.u32 2147483647, %v109
    %v112 = vand.u32 2147483647, %v110
    %vm113 = vcmask 523264
    %v114 = vsel %vm113, %v111, 0.0
    %115 = vadd.xlane.f32.xlu0 %v114
    %v116 = vpop.xlane.xlu0 %115
    %v117 = vsel %vm113, %v112, 0.0
    %118 = vadd.xlane.f32.xlu0 %v117
    %v119 = vpop.xlane.xlu0 %118
    %120 = vst [vmem:[%s8] sm:$0xff] %v116
    %121 = vst [vmem:[%s8 + $0x8] sm:$0xff] %v119
    %v122 = vlaneseq
    %v123 = vshrl.u32 %v122, 7
    %v124 = vadd.s32 %v123, 8
    %v125 = vlaneseq
    %v126 = vand.u32 %v125, 127
    %vm127 = vcmp.eq.s32.totalorder %v123, %v126
    %vm128 = vcmp.eq.s32.totalorder %v124, %v126
    %v129 = vsel %vm127, 1, 0
    %v130 = vsel %vm128, 1, 0
    %v131 = vcvt.s32.f32 %v129
    %v132 = vcvt.s32.f32 %v130
    %v133 = vmul.f32 %v131, %v116
    %v134 = vmul.f32 %v132, %v119
    %v136 = vsel %vm41, 1.0, 0
    %138 = vmatpush.msra.mxu0 0.0
    %139 = vmatpush.msra.mxu0 0.0
    %140 = vmatpush.msra.mxu0 0.0
    %141 = vmatpush.msra.mxu0 0.0
    %142 = vmatpush.msra.mxu0 0.0
    %143 = vmatpush.msra.mxu0 0.0
    %144 = vmatpush.msra.mxu0 0.0
    %145 = vmatpush.msra.mxu0 0.0
    %146 = vmatpush.msra.mxu0 0.0
    %147 = vmatpush.msra.mxu0 0.0
    %148 = vmatpush.msra.mxu0 0.0
    %149 = vmatpush.msra.mxu0 0.0
    %150 = vmatpush.msra.mxu0 0.0
    %151 = vmatpush.msra.mxu0 0.0
    %152 = vmatpush.msra.mxu0 %v134
    %153 = vmatpush.msra.mxu0 %v133
    %154 = vmatmul.f32.gmra.mxu0 %v136
    %v155 = vpop.f32.mrf.mxu0
    %v156 = vadd.f32 0.0, %v155
    %157 = vmatmul.f32.gmra.mxu0 %v136
    %v158 = vpop.f32.mrf.mxu0
    %v159 = vadd.f32 0.0, %v158
    %160 = vdwg.mxu0
    %vm161 = vcmp.gt.f32.partialorder %v156, %v116
    %vm162 = vcmp.gt.f32.partialorder %v159, %v119
    %v163 = vsel %vm161, 1, 0
    %v164 = vsel %vm162, 1, 0
    %v165 = vcvt.s32.f32 %v163
    %v166 = vcvt.s32.f32 %v164
    %vm167 = vcmp.eq.f32.partialorder %v156, %v116
    %vm168 = vcmp.eq.f32.partialorder %v159, %v119
    %vm169 = vcmp.lt.s32.totalorder %v126, %v123
    %vm170 = vcmp.lt.s32.totalorder %v126, %v124
    %vm171 = vmand %vm167, %vm169
    %vm172 = vmand %vm168, %vm170
    %v173 = vsel %vm171, 1, 0
    %v174 = vsel %vm172, 1, 0
    %v175 = vcvt.s32.f32 %v173
    %v176 = vcvt.s32.f32 %v174
    %v177 = vadd.f32 %v165, %v175
    %v178 = vadd.f32 %v166, %v176
    %v179 = vsel %vm41, %v177, 0.0
    %180 = vadd.xlane.f32.xlu0 %v179
    %v181 = vpop.xlane.xlu0 %180
    %v182 = vsel %vm41, %v178, 0.0
    %183 = vadd.xlane.f32.xlu0 %v182
    %v184 = vpop.xlane.xlu0 %183
    %v185 = vmul.f32 %v131, %v181
    %v186 = vmul.f32 %v132, %v184
    %187 = vmatpush.msra.mxu0 0.0
    %188 = vmatpush.msra.mxu0 0.0
    %189 = vmatpush.msra.mxu0 0.0
    %190 = vmatpush.msra.mxu0 0.0
    %191 = vmatpush.msra.mxu0 0.0
    %192 = vmatpush.msra.mxu0 0.0
    %193 = vmatpush.msra.mxu0 0.0
    %194 = vmatpush.msra.mxu0 0.0
    %195 = vmatpush.msra.mxu0 0.0
    %196 = vmatpush.msra.mxu0 0.0
    %197 = vmatpush.msra.mxu0 0.0
    %198 = vmatpush.msra.mxu0 0.0
    %199 = vmatpush.msra.mxu0 0.0
    %200 = vmatpush.msra.mxu0 0.0
    %201 = vmatpush.msra.mxu0 %v186
    %202 = vmatpush.msra.mxu0 %v185
    %203 = vmatmul.f32.gmra.mxu0 %v136
    %v204 = vpop.f32.mrf.mxu0
    %v205 = vadd.f32 0.0, %v204
    %206 = vmatmul.f32.gmra.mxu0 %v136
    %v207 = vpop.f32.mrf.mxu0
    %v208 = vadd.f32 0.0, %v207
    %209 = vdwg.mxu0
    %v210 = vcvt.s32.f32 %v123
    %v211 = vcvt.s32.f32 %v124
    %vm212 = vcmp.eq.f32.partialorder %v205, %v210
    %vm213 = vcmp.eq.f32.partialorder %v208, %v211
    %v214 = vsel %vm212, 1, 0
    %v215 = vsel %vm213, 1, 0
    %v216 = vcvt.s32.f32 %v214
    %v217 = vcvt.s32.f32 %v215
    %v219 = vsel %vm41, %v216, 0
    %v222 = vsel %vm41, %v217, 0
    %224 = vmatpush.msra.mxu0 0.0
    %225 = vmatpush.msra.mxu0 0.0
    %226 = vmatpush.msra.mxu0 0.0
    %227 = vmatpush.msra.mxu0 0.0
    %228 = vmatpush.msra.mxu0 0.0
    %229 = vmatpush.msra.mxu0 0.0
    %230 = vmatpush.msra.mxu0 0.0
    %231 = vmatpush.msra.mxu0 0.0
    %232 = vmatpush.msra.mxu0 0.0
    %233 = vmatpush.msra.mxu0 0.0
    %234 = vmatpush.msra.mxu0 0.0
    %235 = vmatpush.msra.mxu0 0.0
    %236 = vmatpush.msra.mxu0 0.0
    %237 = vmatpush.msra.mxu0 0.0
    %238 = vmatpush.msra.mxu0 %v45
    %239 = vmatpush.msra.mxu0 %v44
    %240 = vmatmul.f32.gmra.mxu0 %v219
    %v241 = vpop.f32.mrf.mxu0
    %v242 = vadd.f32 0.0, %v241
    %243 = vmatmul.f32.gmra.mxu0 %v222
    %v244 = vpop.f32.mrf.mxu0
    %v245 = vadd.f32 0.0, %v244
    %246 = vdwg.mxu0
    %247 = vmatpush.msra.mxu0 0.0
    %248 = vmatpush.msra.mxu0 0.0
    %249 = vmatpush.msra.mxu0 0.0
    %250 = vmatpush.msra.mxu0 0.0
    %251 = vmatpush.msra.mxu0 0.0
    %252 = vmatpush.msra.mxu0 0.0
    %253 = vmatpush.msra.mxu0 0.0
    %254 = vmatpush.msra.mxu0 0.0
    %255 = vmatpush.msra.mxu0 0.0
    %256 = vmatpush.msra.mxu0 0.0
    %257 = vmatpush.msra.mxu0 0.0
    %258 = vmatpush.msra.mxu0 0.0
    %259 = vmatpush.msra.mxu0 0.0
    %260 = vmatpush.msra.mxu0 0.0
    %261 = vmatpush.msra.mxu0 %v45
    %262 = vmatpush.msra.mxu0 %v44
    %263 = vmatmul.f32.gmra.mxu0 %v79
    %v264 = vpop.f32.mrf.mxu0
    %v265 = vadd.f32 0.0, %v264
    %266 = vmatmul.f32.gmra.mxu0 %v82
    %v267 = vpop.f32.mrf.mxu0
    %v268 = vadd.f32 0.0, %v267
    %269 = vdwg.mxu0
    %270 = vmatpush.msra.mxu0 0.0
    %271 = vmatpush.msra.mxu0 0.0
    %272 = vmatpush.msra.mxu0 0.0
    %273 = vmatpush.msra.mxu0 0.0
    %274 = vmatpush.msra.mxu0 0.0
    %275 = vmatpush.msra.mxu0 0.0
    %276 = vmatpush.msra.mxu0 0.0
    %277 = vmatpush.msra.mxu0 0.0
    %278 = vmatpush.msra.mxu0 0.0
    %279 = vmatpush.msra.mxu0 0.0
    %280 = vmatpush.msra.mxu0 0.0
    %281 = vmatpush.msra.mxu0 0.0
    %282 = vmatpush.msra.mxu0 0.0
    %283 = vmatpush.msra.mxu0 0.0
    %284 = vmatpush.msra.mxu0 %v268
    %285 = vmatpush.msra.mxu0 %v265
    %286 = vmatmul.f32.gmra.mxu0 %v219
    %v287 = vpop.f32.mrf.mxu0
    %v288 = vadd.f32 0.0, %v287
    %289 = vmatmul.f32.gmra.mxu0 %v222
    %v290 = vpop.f32.mrf.mxu0
    %v291 = vadd.f32 0.0, %v290
    %292 = vdwg.mxu0
    %v293 = vld [vmem:[%s3] sm:$0xff]
    %v294 = vld [vmem:[%s3 + $0x8] sm:$0xff]
    %v295 = vld [vmem:[%s3 + $0x10] sm:$0xff]
    %v296 = vld [vmem:[%s3 + $0x18] sm:$0xff]
    %v297 = vld [vmem:[%s3 + $0x20] sm:$0xff]
    %v298 = vld [vmem:[%s3 + $0x28] sm:$0xff]
    %v299 = vld [vmem:[%s3 + $0x30] sm:$0xff]
    %v300 = vld [vmem:[%s3 + $0x38] sm:$0xff]
    %v301 = vld [vmem:[%s4] sm:$0xff]
    %v302 = vld [vmem:[%s4 + $0x8] sm:$0xff]
    %v303 = vld [vmem:[%s4 + $0x10] sm:$0xff]
    %v304 = vld [vmem:[%s4 + $0x18] sm:$0xff]
    %v305 = vld [vmem:[%s4 + $0x20] sm:$0xff]
    %v306 = vld [vmem:[%s4 + $0x28] sm:$0xff]
    %v307 = vld [vmem:[%s4 + $0x30] sm:$0xff]
    %v308 = vld [vmem:[%s4 + $0x38] sm:$0xff]
    %v310 = vsel %vm113, %v288, 0
    %v313 = vsel %vm113, %v291, 0
    %315 = vmatpush.msra.mxu0 0.0
    %316 = vmatpush.msra.mxu0 0.0
    %317 = vmatpush.msra.mxu0 0.0
    %318 = vmatpush.msra.mxu0 0.0
    %319 = vmatpush.msra.mxu0 0.0
    %320 = vmatpush.msra.mxu0 0.0
    %321 = vmatpush.msra.mxu0 0.0
    %322 = vmatpush.msra.mxu0 0.0
    %323 = vmatpush.msra.mxu0 %v308
    %324 = vmatpush.msra.mxu0 %v307
    %325 = vmatpush.msra.mxu0 %v306
    %326 = vmatpush.msra.mxu0 %v305
    %327 = vmatpush.msra.mxu0 %v304
    %328 = vmatpush.msra.mxu0 %v303
    %329 = vmatpush.msra.mxu0 %v302
    %330 = vmatpush.msra.mxu0 %v301
    %331 = vmatmul.f32.gmra.mxu0 %v310
    %v332 = vpop.f32.mrf.mxu0
    %v333 = vadd.f32 0.0, %v332
    %334 = vmatmul.f32.gmra.mxu0 %v313
    %v335 = vpop.f32.mrf.mxu0
    %v336 = vadd.f32 0.0, %v335
    %337 = vdwg.mxu0
    %v339 = vsel %vm113, %v242, 0
    %v342 = vsel %vm113, %v245, 0
    %344 = vmatpush.msra.mxu0 0.0
    %345 = vmatpush.msra.mxu0 0.0
    %346 = vmatpush.msra.mxu0 0.0
    %347 = vmatpush.msra.mxu0 0.0
    %348 = vmatpush.msra.mxu0 0.0
    %349 = vmatpush.msra.mxu0 0.0
    %350 = vmatpush.msra.mxu0 0.0
    %351 = vmatpush.msra.mxu0 0.0
    %352 = vmatpush.msra.mxu0 %v300
    %353 = vmatpush.msra.mxu0 %v299
    %354 = vmatpush.msra.mxu0 %v298
    %355 = vmatpush.msra.mxu0 %v297
    %356 = vmatpush.msra.mxu0 %v296
    %357 = vmatpush.msra.mxu0 %v295
    %358 = vmatpush.msra.mxu0 %v294
    %359 = vmatpush.msra.mxu0 %v293
    %360 = vmatmul.f32.gmra.mxu0 %v339
    %v361 = vpop.f32.mrf.mxu0
    %v362 = vadd.f32 %v333, %v361
    %363 = vmatmul.f32.gmra.mxu0 %v342
    %v364 = vpop.f32.mrf.mxu0
    %v365 = vadd.f32 %v336, %v364
    %366 = vdwg.mxu0
    %v367 = vld [vmem:[%s5] sm:$0x1]
    %v369 = vperm.slane %v367, 0
    %v371 = vadd.f32 %v362, %v369
    %v372 = vadd.f32 %v365, %v369
    %v373 = vmax.f32 %v371, 0.0
    %v374 = vmax.f32 %v372, 0.0
    %375 = vst.msk [vmem:[#allocation3] sm:$0xff] %vm113, %v373
    %vm376 = vcmask 520192
    %377 = vst.msk [vmem:[#allocation3 + $0x8] sm:$0x1f] %vm376, %v374
    // Predicated region
    $region26: #{forward.3} parent=1 // pred_check
      _
    $region27: #{forward.3} parent=1 // pred_check_branch
      %379 = sbr.rel (0) target = $region29
    $region28: #{forward.3} parent=1 // pred_region
      %381 = vsyncadd [#allocation4], 0
      %s382 = sshll.u32 [#allocation3], 4
      %s383 = int_to_ptr.vmem [resolvable:$true] %s382
      %s384 = sshll.u32 %s6, 4
      %s385 = int_to_ptr.hbm [resolvable:$true] %s384
      %390 = dma.vmem_to_hbm [thread:$0]  %s383, 256, %s385, [#allocation4], 128, 128, 8
    $region29: #{forward.3} parent=1 // pred_fallthru
      _
    // Predicated region
    $region30: #{forward.3} parent=1 // pred_check
      _
    $region31: #{forward.3} parent=1 // pred_check_branch
      %392 = sbr.rel (0) target = $region33
    $region32: #{forward.3} parent=1 // pred_region
      %394 = vsyncadd [#allocation6], 0
      %s395 = sshll.u32 [#allocation5], 4
      %s396 = int_to_ptr.vmem [resolvable:$true] %s395
      %s397 = sshll.u32 %s7, 4
      %s398 = int_to_ptr.hbm [resolvable:$true] %s397
      %403 = dma.vmem_to_hbm [thread:$0]  %s396, 256, %s398, [#allocation6], 128, 128, 8
    $region33: #{forward.3} parent=1 // pred_fallthru
      _
    // Predicated region
    $region34: #{forward.3} parent=1 // pred_check
      _
    $region35: #{forward.3} parent=1 // pred_check_branch
      %405 = sbr.rel (0) target = $region37
    $region36: #{forward.3} parent=1 // pred_region
      _
    $region37: #{forward.3} parent=1 // pred_fallthru
      _
    // Predicated region
    $region38: #{forward.3} parent=1 // pred_check
      _
    $region39: #{forward.3} parent=1 // pred_check_branch
      %407 = sbr.rel (0) target = $region41
    $region40: #{forward.3} parent=1 // pred_region
      %409 = dma.done [#allocation4], 256
    $region41: #{forward.3} parent=1 // pred_fallthru
      _
    // Predicated region
    $region42: #{forward.3} parent=1 // pred_check
      _
    $region43: #{forward.3} parent=1 // pred_check_branch
      %411 = sbr.rel (0) target = $region45
    $region44: #{forward.3} parent=1 // pred_region
      %413 = dma.done [#allocation6], 256
    $region45: #{forward.3} parent=1 // pred_fallthru
      _
    // Predicated region
    $region46: #{forward.3} parent=1 // pred_check
      _
    $region47: #{forward.3} parent=1 // pred_check_branch
      %415 = sbr.rel (0) target = $region49
    $region48: #{forward.3} parent=1 // pred_region
      _
    $region49: #{forward.3} parent=1 // pred_fallthru
      _
    %416 = vsyncpa [#allocation4], 1
    %417 = vsyncpa [#allocation6], 1

</llo_original>
